<compile_context>
chip_gen: v5e
topology: v5e:2x2
jax: 0.10.0
libtpu: 0.0.40
codegen_flags: <defaults>
</compile_context>

<pallas_src>
import jax
import jax.numpy as jnp
import numpy as np
from jax.experimental import pallas as pl
from jax.experimental.pallas import tpu as pltpu

LANE = 128  # vreg lane width; every packed matmul output is a multiple of this.


# ----------------------------- fused Pallas kernel -----------------------------

def fused_net_kernel(x_ref, w0_ref, b0_ref, w1_ref, b1_ref,
                     wf1_ref, bf1_ref, wf2_ref, bf2_ref, wf3_ref, bf3_ref,
                     out_ref):
    """Entire Net forward (T == 1) with all activations kept in vregs/VMEM.

    x:          (B, Din)
    w0, b0:     (Din, 3*128), (1, 3*128)      layer-0 packed [i|g|o] x [fwd|bwd|pad]
    w1, b1:     (128, 3*128), (1, 3*128)      layer-1 packed (input rows 64..127 = 0)
    wf1..wf3:   (128, 128) zero-padded fc weights; bf1..bf3: (1, 128)
    out:        (B, 128); only column 0 is the fc3 result.
    """

    def bidir_lstm_layer(x, w_ref, b_ref):
        # Single 256-wide-per-direction gate matmul for BOTH directions (T=1 means
        # fwd and bwd see the same input and the recurrent term is zero).
        g = jnp.dot(x, w_ref[...], preferred_element_type=jnp.float32) + b_ref[...]
        i_g = jax.nn.sigmoid(g[:, 0 * LANE:1 * LANE])   # [i_fwd | i_bwd | pad]
        g_g = jnp.tanh(g[:, 1 * LANE:2 * LANE])         # [g_fwd | g_bwd | pad]
        o_g = jax.nn.sigmoid(g[:, 2 * LANE:3 * LANE])   # [o_fwd | o_bwd | pad]
        # c = i*g (f*c0 == 0), h = o*tanh(c); padding lanes stay exactly 0.
        return o_g * jnp.tanh(i_g * g_g)                # (B, 128) = [h_fwd | h_bwd | 0]

    h = bidir_lstm_layer(x_ref[...], w0_ref, b0_ref)    # LSTM layer 0 (both dirs)
    h = bidir_lstm_layer(h, w1_ref, b1_ref)             # LSTM layer 1 (both dirs)

    a = jnp.dot(h, wf1_ref[...], preferred_element_type=jnp.float32) + bf1_ref[...]
    a = jnp.maximum(a, 0.0)                             # relu(fc1)   (120 -> padded 128)
    a = jnp.dot(a, wf2_ref[...], preferred_element_type=jnp.float32) + bf2_ref[...]
    a = jnp.maximum(a, 0.0)                             # relu(fc2)   (84 -> padded 128)
    out_ref[...] = (jnp.dot(a, wf3_ref[...], preferred_element_type=jnp.float32)
                    + bf3_ref[...])                     # fc3, lane-dense store


# ----------------------------- wrapper -----------------------------

def net_forward(x, packed):
    """x: (B, 1, input_size) -> (B, 1)."""
    B = x.shape[0]
    x2d = x.reshape(B, -1)                              # T == 1
    args = (x2d,) + tuple(packed)

    vmem_spec = pl.BlockSpec(memory_space=pltpu.MemorySpace.VMEM)
    flops = 0
    for w in (packed[0], packed[2], packed[4], packed[6], packed[8]):
        flops += 2 * B * int(w.shape[0]) * int(w.shape[1])
    bytes_accessed = sum(int(np.prod(a.shape)) * 4 for a in args) + B * LANE * 4

    out = pl.pallas_call(
        fused_net_kernel,
        out_shape=jax.ShapeDtypeStruct((B, LANE), jnp.float32),
        in_specs=[vmem_spec] * len(args),
        out_specs=vmem_spec,
        cost_estimate=pl.CostEstimate(
            flops=flops,
            transcendentals=2 * B * 4 * LANE,           # 2 layers x (2 sigmoid + 2 tanh) slabs
            bytes_accessed=bytes_accessed),
    )(*args)
    return out[:, :1]                                   # fc3 output lives in column 0


net_forward_jit = jax.jit(net_forward)


# ----------------------------- parameter init (PyTorch layout) -----------------------------

def init_torch_style_params(key, input_size, hidden_size, num_layers):
    """Mimics torch defaults: all params ~ U(-1/sqrt(fan), 1/sqrt(fan))."""
    H = hidden_size
    k = 1.0 / np.sqrt(H)

    def uni(key, shape, bound):
        return jax.random.uniform(key, shape, jnp.float32, -bound, bound)

    lstm = {}
    for layer in range(num_layers):
        d_in = input_size if layer == 0 else 2 * H
        for direction in range(2):                      # 0 = forward, 1 = reverse
            key, k1, k2, k3, k4 = jax.random.split(key, 5)
            lstm[(layer, direction)] = dict(
                w_ih=uni(k1, (4 * H, d_in), k),         # rows ordered [i | f | g | o]
                w_hh=uni(k2, (4 * H, H), k),
                b_ih=uni(k3, (4 * H,), k),
                b_hh=uni(k4, (4 * H,), k),
            )

    def linear(key, fan_in, fan_out):
        key, kw, kb = jax.random.split(key, 3)
        bound = 1.0 / np.sqrt(fan_in)
        return key, uni(kw, (fan_out, fan_in), bound), uni(kb, (fan_out,), bound)

    key, w1, b1 = linear(key, 2 * H, 120)
    key, w2, b2 = linear(key, 120, 84)
    key, w3, b3 = linear(key, 84, 1)
    return lstm, (w1, b1, w2, b2, w3, b3)


def pack_params(lstm, mlp, input_size, hidden_size):
    """Pack PyTorch-layout params into the fused kernel's lane-dense layout."""
    H = hidden_size
    assert 2 * H <= LANE, "packing assumes 2*hidden_size <= 128"

    def pack_layer(layer, d_in, d_in_pad):
        fwd, bwd = lstm[(layer, 0)], lstm[(layer, 1)]
        w_slabs, b_slabs = [], []
        for g in (0, 2, 3):                             # i, g, o (forget gate unused at T=1)
            w = np.zeros((d_in_pad, LANE), np.float32)
            b = np.zeros((LANE,), np.float32)
            for d, p in enumerate((fwd, bwd)):
                w[:d_in, d * H:(d + 1) * H] = np.asarray(p["w_ih"])[g * H:(g + 1) * H, :].T
                b[d * H:(d + 1) * H] = np.asarray(p["b_ih"] + p["b_hh"])[g * H:(g + 1) * H]
            w_slabs.append(w)
            b_slabs.append(b)
        return (jnp.asarray(np.concatenate(w_slabs, axis=1)),
                jnp.asarray(np.concatenate(b_slabs)[None, :]))

    w0, b0 = pack_layer(0, input_size, input_size)      # (Din, 384)
    w1, b1 = pack_layer(1, 2 * H, LANE)                 # (128, 384), rows >= 2H are zero

    def pad_linear(w, b):                               # torch Linear: w (out, in), b (out,)
        fan_in, fan_out = w.shape[1], w.shape[0]
        wp = np.zeros((LANE, LANE), np.float32)
        bp = np.zeros((1, LANE), np.float32)
        wp[:fan_in, :fan_out] = np.asarray(w).T
        bp[0, :fan_out] = np.asarray(b)
        return jnp.asarray(wp), jnp.asarray(bp)

    wf1, bf1 = pad_linear(mlp[0], mlp[1])
    wf2, bf2 = pad_linear(mlp[2], mlp[3])
    wf3, bf3 = pad_linear(mlp[4], mlp[5])
    return (w0, b0, w1, b1, wf1, bf1, wf2, bf2, wf3, bf3)


# ----------------------------- pure-JAX reference (full, unspecialized LSTM) -----------------------------

def reference_forward(x, lstm, mlp, hidden_size, num_layers):
    H = hidden_size
    B, T, _ = x.shape
    hp = jax.lax.Precision.HIGHEST
    mm = lambda a, b: jnp.dot(a, b, precision=hp)
    layer_in = x
    for layer in range(num_layers):
        outs = []
        for direction in range(2):
            p = lstm[(layer, direction)]
            h = jnp.zeros((B, H), jnp.float32)
            c = jnp.zeros((B, H), jnp.float32)
            order = range(T) if direction == 0 else range(T - 1, -1, -1)
            hs = [None] * T
            for t in order:
                g = (mm(layer_in[:, t, :], p["w_ih"].T) + p["b_ih"]
                     + mm(h, p["w_hh"].T) + p["b_hh"])
                i = jax.nn.sigmoid(g[:, 0 * H:1 * H])
                f = jax.nn.sigmoid(g[:, 1 * H:2 * H])
                gg = jnp.tanh(g[:, 2 * H:3 * H])
                o = jax.nn.sigmoid(g[:, 3 * H:4 * H])
                c = f * c + i * gg
                h = o * jnp.tanh(c)
                hs[t] = h
            outs.append(jnp.stack(hs, axis=1))
        layer_in = jnp.concatenate(outs, axis=-1)
    out = layer_in.reshape(B, -1)
    w1, b1, w2, b2, w3, b3 = mlp
    out = jax.nn.relu(mm(out, w1.T) + b1)
    out = jax.nn.relu(mm(out, w2.T) + b2)
    return mm(out, w3.T) + b3


# ----------------------------- main -----------------------------

if __name__ == "__main__":
    batch = 2
    input_size = 16
    hidden_size = 32
    num_layers = 2
    sequence_length = 1   # only value for which the PyTorch module's fc1 shapes check out

    key = jax.random.PRNGKey(0)
    key, kx = jax.random.split(key)
    x = jax.random.normal(kx, (batch, sequence_length, input_size), jnp.float32)

    lstm_params, mlp_params = init_torch_style_params(key, input_size, hidden_size, num_layers)
    packed = pack_params(lstm_params, mlp_params, input_size, hidden_size)

    out = jax.block_until_ready(net_forward_jit(x, packed))
    assert out.shape == (batch, 1), out.shape

    # Validate the fused/specialized kernel against the full unspecialized reference.
    ref = jax.block_until_ready(reference_forward(x, lstm_params, mlp_params,
                                                  hidden_size, num_layers))
    np.testing.assert_allclose(np.asarray(out), np.asarray(ref), rtol=1e-3, atol=1e-3)

    print("KERNEL_OK")
</pallas_src>

<mosaic_0001>
module attributes {stable_mosaic.version = 11 : i64} {
  func.func @fused_net_kernel(%arg0: memref<2x16xf32, #tpu.memory_space<vmem>>, %arg1: memref<16x384xf32, #tpu.memory_space<vmem>>, %arg2: memref<1x384xf32, #tpu.memory_space<vmem>>, %arg3: memref<128x384xf32, #tpu.memory_space<vmem>>, %arg4: memref<1x384xf32, #tpu.memory_space<vmem>>, %arg5: memref<128x128xf32, #tpu.memory_space<vmem>>, %arg6: memref<1x128xf32, #tpu.memory_space<vmem>>, %arg7: memref<128x128xf32, #tpu.memory_space<vmem>>, %arg8: memref<1x128xf32, #tpu.memory_space<vmem>>, %arg9: memref<128x128xf32, #tpu.memory_space<vmem>>, %arg10: memref<1x128xf32, #tpu.memory_space<vmem>>, %arg11: memref<2x128xf32, #tpu.memory_space<vmem>>) attributes {dimension_semantics = [], scalar_prefetch = 0 : i64, scratch_operands = 0 : i64, tpu.core_type = #tpu.core_type<tc>} {
    %c0 = arith.constant 0 : index
    %c0_0 = arith.constant 0 : index
    %0 = vector.load %arg0[%c0, %c0_0] : memref<2x16xf32, #tpu.memory_space<vmem>>, vector<2x16xf32>
    %c0_1 = arith.constant 0 : index
    %c0_2 = arith.constant 0 : index
    %1 = vector.load %arg1[%c0_1, %c0_2] : memref<16x384xf32, #tpu.memory_space<vmem>>, vector<16x384xf32>
    %cst = arith.constant dense<0.000000e+00> : vector<2x384xf32>
    %2 = tpu.matmul %0, %1, %cst {dimension_numbers = #tpu.dot_dimension_numbers<[1], [0], [0], [1], [0, 0, 1, 1], [], []>} : vector<2x16xf32>, vector<16x384xf32>, vector<2x384xf32> -> vector<2x384xf32>
    %c0_3 = arith.constant 0 : index
    %c0_4 = arith.constant 0 : index
    %3 = vector.load %arg2[%c0_3, %c0_4] : memref<1x384xf32, #tpu.memory_space<vmem>>, vector<1x384xf32>
    %4 = vector.broadcast %3 : vector<1x384xf32> to vector<2x384xf32>
    %5 = arith.addf %2, %4 : vector<2x384xf32>
    %6 = vector.extract_strided_slice %5 {offsets = [0, 0], sizes = [2, 128], strides = [1, 1]} : vector<2x384xf32> to vector<2x128xf32>
    %7 = arith.negf %6 : vector<2x128xf32>
    %8 = math.exp %7 : vector<2x128xf32>
    %cst_5 = arith.constant 1.000000e+00 : f32
    %9 = vector.broadcast %cst_5 : f32 to vector<2x128xf32>
    %10 = arith.addf %9, %8 : vector<2x128xf32>
    %11 = arith.divf %9, %10 : vector<2x128xf32>
    %12 = vector.extract_strided_slice %5 {offsets = [0, 128], sizes = [2, 128], strides = [1, 1]} : vector<2x384xf32> to vector<2x128xf32>
    %13 = math.tanh %12 : vector<2x128xf32>
    %14 = vector.extract_strided_slice %5 {offsets = [0, 256], sizes = [2, 128], strides = [1, 1]} : vector<2x384xf32> to vector<2x128xf32>
    %15 = arith.negf %14 : vector<2x128xf32>
    %16 = math.exp %15 : vector<2x128xf32>
    %cst_6 = arith.constant 1.000000e+00 : f32
    %17 = vector.broadcast %cst_6 : f32 to vector<2x128xf32>
    %18 = arith.addf %17, %16 : vector<2x128xf32>
    %19 = arith.divf %17, %18 : vector<2x128xf32>
    %20 = arith.mulf %11, %13 : vector<2x128xf32>
    %21 = math.tanh %20 : vector<2x128xf32>
    %22 = arith.mulf %19, %21 : vector<2x128xf32>
    %c0_7 = arith.constant 0 : index
    %c0_8 = arith.constant 0 : index
    %23 = vector.load %arg3[%c0_7, %c0_8] : memref<128x384xf32, #tpu.memory_space<vmem>>, vector<128x384xf32>
    %cst_9 = arith.constant dense<0.000000e+00> : vector<2x384xf32>
    %24 = tpu.matmul %22, %23, %cst_9 {dimension_numbers = #tpu.dot_dimension_numbers<[1], [0], [0], [1], [0, 0, 1, 1], [], []>} : vector<2x128xf32>, vector<128x384xf32>, vector<2x384xf32> -> vector<2x384xf32>
    %c0_10 = arith.constant 0 : index
    %c0_11 = arith.constant 0 : index
    %25 = vector.load %arg4[%c0_10, %c0_11] : memref<1x384xf32, #tpu.memory_space<vmem>>, vector<1x384xf32>
    %26 = vector.broadcast %25 : vector<1x384xf32> to vector<2x384xf32>
    %27 = arith.addf %24, %26 : vector<2x384xf32>
    %28 = vector.extract_strided_slice %27 {offsets = [0, 0], sizes = [2, 128], strides = [1, 1]} : vector<2x384xf32> to vector<2x128xf32>
    %29 = arith.negf %28 : vector<2x128xf32>
    %30 = math.exp %29 : vector<2x128xf32>
    %cst_12 = arith.constant 1.000000e+00 : f32
    %31 = vector.broadcast %cst_12 : f32 to vector<2x128xf32>
    %32 = arith.addf %31, %30 : vector<2x128xf32>
    %33 = arith.divf %31, %32 : vector<2x128xf32>
    %34 = vector.extract_strided_slice %27 {offsets = [0, 128], sizes = [2, 128], strides = [1, 1]} : vector<2x384xf32> to vector<2x128xf32>
    %35 = math.tanh %34 : vector<2x128xf32>
    %36 = vector.extract_strided_slice %27 {offsets = [0, 256], sizes = [2, 128], strides = [1, 1]} : vector<2x384xf32> to vector<2x128xf32>
    %37 = arith.negf %36 : vector<2x128xf32>
    %38 = math.exp %37 : vector<2x128xf32>
    %cst_13 = arith.constant 1.000000e+00 : f32
    %39 = vector.broadcast %cst_13 : f32 to vector<2x128xf32>
    %40 = arith.addf %39, %38 : vector<2x128xf32>
    %41 = arith.divf %39, %40 : vector<2x128xf32>
    %42 = arith.mulf %33, %35 : vector<2x128xf32>
    %43 = math.tanh %42 : vector<2x128xf32>
    %44 = arith.mulf %41, %43 : vector<2x128xf32>
    %c0_14 = arith.constant 0 : index
    %c0_15 = arith.constant 0 : index
    %45 = vector.load %arg5[%c0_14, %c0_15] : memref<128x128xf32, #tpu.memory_space<vmem>>, vector<128x128xf32>
    %cst_16 = arith.constant dense<0.000000e+00> : vector<2x128xf32>
    %46 = tpu.matmul %44, %45, %cst_16 {dimension_numbers = #tpu.dot_dimension_numbers<[1], [0], [0], [1], [0, 0, 1, 1], [], []>} : vector<2x128xf32>, vector<128x128xf32>, vector<2x128xf32> -> vector<2x128xf32>
    %c0_17 = arith.constant 0 : index
    %c0_18 = arith.constant 0 : index
    %47 = vector.load %arg6[%c0_17, %c0_18] : memref<1x128xf32, #tpu.memory_space<vmem>>, vector<1x128xf32>
    %48 = vector.broadcast %47 : vector<1x128xf32> to vector<2x128xf32>
    %49 = arith.addf %46, %48 : vector<2x128xf32>
    %cst_19 = arith.constant 0.000000e+00 : f32
    %50 = vector.broadcast %cst_19 : f32 to vector<2x128xf32>
    %51 = arith.maximumf %49, %50 : vector<2x128xf32>
    %c0_20 = arith.constant 0 : index
    %c0_21 = arith.constant 0 : index
    %52 = vector.load %arg7[%c0_20, %c0_21] : memref<128x128xf32, #tpu.memory_space<vmem>>, vector<128x128xf32>
    %cst_22 = arith.constant dense<0.000000e+00> : vector<2x128xf32>
    %53 = tpu.matmul %51, %52, %cst_22 {dimension_numbers = #tpu.dot_dimension_numbers<[1], [0], [0], [1], [0, 0, 1, 1], [], []>} : vector<2x128xf32>, vector<128x128xf32>, vector<2x128xf32> -> vector<2x128xf32>
    %c0_23 = arith.constant 0 : index
    %c0_24 = arith.constant 0 : index
    %54 = vector.load %arg8[%c0_23, %c0_24] : memref<1x128xf32, #tpu.memory_space<vmem>>, vector<1x128xf32>
    %55 = vector.broadcast %54 : vector<1x128xf32> to vector<2x128xf32>
    %56 = arith.addf %53, %55 : vector<2x128xf32>
    %cst_25 = arith.constant 0.000000e+00 : f32
    %57 = vector.broadcast %cst_25 : f32 to vector<2x128xf32>
    %58 = arith.maximumf %56, %57 : vector<2x128xf32>
    %c0_26 = arith.constant 0 : index
    %c0_27 = arith.constant 0 : index
    %59 = vector.load %arg9[%c0_26, %c0_27] : memref<128x128xf32, #tpu.memory_space<vmem>>, vector<128x128xf32>
    %cst_28 = arith.constant dense<0.000000e+00> : vector<2x128xf32>
    %60 = tpu.matmul %58, %59, %cst_28 {dimension_numbers = #tpu.dot_dimension_numbers<[1], [0], [0], [1], [0, 0, 1, 1], [], []>} : vector<2x128xf32>, vector<128x128xf32>, vector<2x128xf32> -> vector<2x128xf32>
    %c0_29 = arith.constant 0 : index
    %c0_30 = arith.constant 0 : index
    %61 = vector.load %arg10[%c0_29, %c0_30] : memref<1x128xf32, #tpu.memory_space<vmem>>, vector<1x128xf32>
    %62 = vector.broadcast %61 : vector<1x128xf32> to vector<2x128xf32>
    %63 = arith.addf %60, %62 : vector<2x128xf32>
    %c0_31 = arith.constant 0 : index
    %c0_32 = arith.constant 0 : index
    %64 = vector.load %arg11[%c0_31, %c0_32] : memref<2x128xf32, #tpu.memory_space<vmem>>, vector<2x128xf32>
    tpu.vector_store %arg11[%c0_31, %c0_32], %63 {strides = array<i32>} : memref<2x128xf32, #tpu.memory_space<vmem>>, vector<2x128xf32>,
    return
  }
}

</mosaic_0001>

<llo_original>
// kernel: net_forward.1
$region0: #{net_forward.1}
  #allocation0 [shape = 'u32[]', space=smem, size = 0x4, offset = 0x4, fixed_abs, tag = 'smem constant byte address 0x4 - core index']
  #allocation1 [shape = 'u32[72,128]{1,0:T(1,128)}', space=vmem, size = 0x9000, scoped, tag = 'internal scratch']
  %s0 = inlined_call_operand.hbm [shape: f32[2,16], index: 0, kind: input, shape index: {}]
  %s1 = inlined_call_operand.hbm [shape: f32[16,384], index: 1, kind: input, shape index: {}]
  %s2 = inlined_call_operand.hbm [shape: f32[1,384], index: 2, kind: input, shape index: {}]
  %s3 = inlined_call_operand.hbm [shape: f32[128,384], index: 3, kind: input, shape index: {}]
  %s4 = inlined_call_operand.vmem [shape: f32[1,384], index: 4, kind: input, shape index: {}]
  %s5 = inlined_call_operand.hbm [shape: f32[128,128], index: 5, kind: input, shape index: {}]
  %s6 = inlined_call_operand.vmem [shape: f32[1,128], index: 6, kind: input, shape index: {}]
  %s7 = inlined_call_operand.hbm [shape: f32[128,128], index: 7, kind: input, shape index: {}]
  %s8 = inlined_call_operand.vmem [shape: f32[1,128], index: 8, kind: input, shape index: {}]
  %s9 = inlined_call_operand.hbm [shape: f32[128,128], index: 9, kind: input, shape index: {}]
  %s10 = inlined_call_operand.vmem [shape: f32[1,128], index: 10, kind: input, shape index: {}]
  %s11 = inlined_call_operand.vmem [shape: f32[2,128], index: 11, kind: output, shape index: {}]
  %s12 = sld [smem:[#allocation0]]
  $region82: #{net_forward.1} parent=0
    _
  %s14 = ssub.s32 1, %s12
  %s15 = scalar_select 0, %s14, %s12
  $region1: #{net_forward.1} parent=0
    #allocation2 [shape = 'u8[1024]{0}', space=vmem, size = 0x400, scoped, tag = 'input window, operand 0, single buffered']
    #allocation3 [shape = 's32[1]{0}', space=sflag, size = 0x4, scoped, tag = 'scoped memory for net_forward.1']
    #allocation4 [shape = 'u8[24576]{0}', space=vmem, size = 0x6000, scoped, tag = 'input window, operand 1, single buffered']
    #allocation5 [shape = 's32[1]{0}', space=sflag, size = 0x4, scoped, tag = 'scoped memory for net_forward.1']
    #allocation6 [shape = 'u8[1536]{0}', space=vmem, size = 0x800, scoped, tag = 'input window, operand 2, single buffered']
    #allocation7 [shape = 'u8[196608]{0}', space=vmem, size = 0x30000, scoped, tag = 'input window, operand 3, single buffered']
    #allocation8 [shape = 's32[1]{0}', space=sflag, size = 0x4, scoped, tag = 'scoped memory for net_forward.1']
    #allocation9 [shape = 'u8[65536]{0}', space=vmem, size = 0x10000, scoped, tag = 'input window, operand 5, single buffered']
    #allocation10 [shape = 'u8[65536]{0}', space=vmem, size = 0x10000, scoped, tag = 'input window, operand 7, single buffered']
    #allocation11 [shape = 's32[1]{0}', space=sflag, size = 0x4, scoped, tag = 'scoped memory for net_forward.1']
    #allocation12 [shape = 'u8[65536]{0}', space=vmem, size = 0x10000, scoped, tag = 'input window, operand 9, single buffered']
    %16 = vsyncpa [#allocation3], 0
    %17 = vsyncpa [#allocation5], 0
    %18 = vsyncpa [#allocation8], 0
    %19 = vsyncpa [#allocation11], 0
    // Predicated region
    $region2: #{net_forward.1} parent=1 // pred_check
      _
    $region3: #{net_forward.1} parent=1 // pred_check_branch
      %21 = sbr.rel (0) target = $region5
    $region4: #{net_forward.1} parent=1 // pred_region
      %23 = vsyncadd [#allocation3], 0
      %s25 = sshll.u32 %s0, 4
      %s26 = int_to_ptr.hbm [resolvable:$true] %s25
      %s27 = sshll.u32 [#allocation2], 4
      %s28 = int_to_ptr.vmem [resolvable:$true] %s27
      %30 = dma.hbm_to_vmem [thread:$0]  %s26, 32, %s28, [#allocation3]
    $region5: #{net_forward.1} parent=1 // pred_fallthru
      _
    // Predicated region
    $region6: #{net_forward.1} parent=1 // pred_check
      _
    $region7: #{net_forward.1} parent=1 // pred_check_branch
      %32 = sbr.rel (0) target = $region9
    $region8: #{net_forward.1} parent=1 // pred_region
      %34 = vsyncadd [#allocation5], 0
      %s35 = sshll.u32 %s1, 4
      %s36 = int_to_ptr.hbm [resolvable:$true] %s35
      %s37 = sshll.u32 [#allocation4], 4
      %s38 = int_to_ptr.vmem [resolvable:$true] %s37
      %43 = dma.hbm_to_vmem [thread:$0]  %s36, 768, %s38, [#allocation5], 384, 384, 24
    $region9: #{net_forward.1} parent=1 // pred_fallthru
      _
    // Predicated region
    $region10: #{net_forward.1} parent=1 // pred_check
      _
    $region11: #{net_forward.1} parent=1 // pred_check_branch
      %45 = sbr.rel (0) target = $region13
    $region12: #{net_forward.1} parent=1 // pred_region
      %47 = vsyncadd [#allocation5], 0
      %s49 = sshll.u32 %s2, 4
      %s50 = int_to_ptr.hbm [resolvable:$true] %s49
      %s51 = sshll.u32 [#allocation6], 4
      %s52 = int_to_ptr.vmem [resolvable:$true] %s51
      %54 = dma.hbm_to_vmem [thread:$0]  %s50, 48, %s52, [#allocation5]
    $region13: #{net_forward.1} parent=1 // pred_fallthru
      _
    // Predicated region
    $region14: #{net_forward.1} parent=1 // pred_check
      _
    $region15: #{net_forward.1} parent=1 // pred_check_branch
      %56 = sbr.rel (0) target = $region17
    $region16: #{net_forward.1} parent=1 // pred_region
      %58 = vsyncadd [#allocation8], 0
      %s59 = sshll.u32 %s3, 4
      %s60 = int_to_ptr.hbm [resolvable:$true] %s59
      %s61 = sshll.u32 [#allocation7], 4
      %s62 = int_to_ptr.vmem [resolvable:$true] %s61
      %67 = dma.hbm_to_vmem [thread:$0]  %s60, 6144, %s62, [#allocation8], 384, 384, 24
    $region17: #{net_forward.1} parent=1 // pred_fallthru
      _
    // Predicated region
    $region18: #{net_forward.1} parent=1 // pred_check
      _
    $region19: #{net_forward.1} parent=1 // pred_check_branch
      %69 = sbr.rel (0) target = $region21
    $region20: #{net_forward.1} parent=1 // pred_region
      _
    $region21: #{net_forward.1} parent=1 // pred_fallthru
      _
    // Predicated region
    $region22: #{net_forward.1} parent=1 // pred_check
      _
    $region23: #{net_forward.1} parent=1 // pred_check_branch
      %71 = sbr.rel (0) target = $region25
    $region24: #{net_forward.1} parent=1 // pred_region
      %73 = vsyncadd [#allocation8], 0
      %s74 = sshll.u32 %s5, 4
      %s75 = int_to_ptr.hbm [resolvable:$true] %s74
      %s76 = sshll.u32 [#allocation9], 4
      %s77 = int_to_ptr.vmem [resolvable:$true] %s76
      %82 = dma.hbm_to_vmem [thread:$0]  %s75, 2048, %s77, [#allocation8], 128, 128, 8
    $region25: #{net_forward.1} parent=1 // pred_fallthru
      _
    // Predicated region
    $region26: #{net_forward.1} parent=1 // pred_check
      _
    $region27: #{net_forward.1} parent=1 // pred_check_branch
      %84 = sbr.rel (0) target = $region29
    $region28: #{net_forward.1} parent=1 // pred_region
      _
    $region29: #{net_forward.1} parent=1 // pred_fallthru
      _
    // Predicated region
    $region30: #{net_forward.1} parent=1 // pred_check
      _
    $region31: #{net_forward.1} parent=1 // pred_check_branch
      %86 = sbr.rel (0) target = $region33
    $region32: #{net_forward.1} parent=1 // pred_region
      %88 = vsyncadd [#allocation11], 0
      %s89 = sshll.u32 %s7, 4
      %s90 = int_to_ptr.hbm [resolvable:$true] %s89
      %s91 = sshll.u32 [#allocation10], 4
      %s92 = int_to_ptr.vmem [resolvable:$true] %s91
      %97 = dma.hbm_to_vmem [thread:$0]  %s90, 2048, %s92, [#allocation11], 128, 128, 8
    $region33: #{net_forward.1} parent=1 // pred_fallthru
      _
    // Predicated region
    $region34: #{net_forward.1} parent=1 // pred_check
      _
    $region35: #{net_forward.1} parent=1 // pred_check_branch
      %99 = sbr.rel (0) target = $region37
    $region36: #{net_forward.1} parent=1 // pred_region
      _
    $region37: #{net_forward.1} parent=1 // pred_fallthru
      _
    // Predicated region
    $region38: #{net_forward.1} parent=1 // pred_check
      _
    $region39: #{net_forward.1} parent=1 // pred_check_branch
      %101 = sbr.rel (0) target = $region41
    $region40: #{net_forward.1} parent=1 // pred_region
      %103 = vsyncadd [#allocation11], 0
      %s104 = sshll.u32 %s9, 4
      %s105 = int_to_ptr.hbm [resolvable:$true] %s104
      %s106 = sshll.u32 [#allocation12], 4
      %s107 = int_to_ptr.vmem [resolvable:$true] %s106
      %112 = dma.hbm_to_vmem [thread:$0]  %s105, 2048, %s107, [#allocation11], 128, 128, 8
    $region41: #{net_forward.1} parent=1 // pred_fallthru
      _
    // Predicated region
    $region42: #{net_forward.1} parent=1 // pred_check
      _
    $region43: #{net_forward.1} parent=1 // pred_check_branch
      %114 = sbr.rel (0) target = $region45
    $region44: #{net_forward.1} parent=1 // pred_region
      _
    $region45: #{net_forward.1} parent=1 // pred_fallthru
      _
    // Predicated region
    $region46: #{net_forward.1} parent=1 // pred_check
      _
    $region47: #{net_forward.1} parent=1 // pred_check_branch
      %116 = sbr.rel (0) target = $region49
    $region48: #{net_forward.1} parent=1 // pred_region
      %118 = dma.done [#allocation3], 32
    $region49: #{net_forward.1} parent=1 // pred_fallthru
      _
    // Predicated region
    $region50: #{net_forward.1} parent=1 // pred_check
      _
    $region51: #{net_forward.1} parent=1 // pred_check_branch
      %120 = sbr.rel (0) target = $region53
    $region52: #{net_forward.1} parent=1 // pred_region
      %122 = dma.done [#allocation5], 768
    $region53: #{net_forward.1} parent=1 // pred_fallthru
      _
    // Predicated region
    $region54: #{net_forward.1} parent=1 // pred_check
      _
    $region55: #{net_forward.1} parent=1 // pred_check_branch
      %124 = sbr.rel (0) target = $region57
    $region56: #{net_forward.1} parent=1 // pred_region
      %126 = dma.done [#allocation5], 48
    $region57: #{net_forward.1} parent=1 // pred_fallthru
      _
    // Predicated region
    $region58: #{net_forward.1} parent=1 // pred_check
      _
    $region59: #{net_forward.1} parent=1 // pred_check_branch
      %128 = sbr.rel (0) target = $region61
    $region60: #{net_forward.1} parent=1 // pred_region
      %130 = dma.done [#allocation8], 6144
    $region61: #{net_forward.1} parent=1 // pred_fallthru
      _
    // Predicated region
    $region62: #{net_forward.1} parent=1 // pred_check
      _
    $region63: #{net_forward.1} parent=1 // pred_check_branch
      %132 = sbr.rel (0) target = $region65
    $region64: #{net_forward.1} parent=1 // pred_region
      %134 = dma.done [#allocation8], 2048
    $region65: #{net_forward.1} parent=1 // pred_fallthru
      _
    // Predicated region
    $region66: #{net_forward.1} parent=1 // pred_check
      _
    $region67: #{net_forward.1} parent=1 // pred_check_branch
      %136 = sbr.rel (0) target = $region69
    $region68: #{net_forward.1} parent=1 // pred_region
      %138 = dma.done [#allocation11], 2048
    $region69: #{net_forward.1} parent=1 // pred_fallthru
      _
    // Predicated region
    $region70: #{net_forward.1} parent=1 // pred_check
      _
    $region71: #{net_forward.1} parent=1 // pred_check_branch
      %140 = sbr.rel (0) target = $region73
    $region72: #{net_forward.1} parent=1 // pred_region
      %142 = dma.done [#allocation11], 2048
    $region73: #{net_forward.1} parent=1 // pred_fallthru
      _
    %v143 = vld [vmem:[#allocation2] sm:$0x3]
    %v144 = vld [vmem:[#allocation4] sm:$0xff]
    %v145 = vld [vmem:[#allocation4 + $0x8] sm:$0xff]
    %v146 = vld [vmem:[#allocation4 + $0x10] sm:$0xff]
    %v147 = vld [vmem:[#allocation4 + $0x18] sm:$0xff]
    %v148 = vld [vmem:[#allocation4 + $0x20] sm:$0xff]
    %v149 = vld [vmem:[#allocation4 + $0x28] sm:$0xff]
    %v150 = vld [vmem:[#allocation6] sm:$0x7]
    %v152 = vperm.slane %v150, 0
    %v153 = vperm.slane %v150, 1
    %v154 = vperm.slane %v150, 2
    %vm158 = vcmask 130048
    %v160 = vsel %vm158, %v143, 0
    %162 = vmatpush.msra.mxu0 0.0
    %163 = vmatpush.msra.mxu0 0.0
    %164 = vmatpush.msra.mxu0 0.0
    %165 = vmatpush.msra.mxu0 0.0
    %166 = vmatpush.msra.mxu0 0.0
    %167 = vmatpush.msra.mxu0 0.0
    %168 = vmatpush.msra.mxu0 0.0
    %169 = vmatpush.msra.mxu0 0.0
    %170 = vmatpush.msra.mxu0 0.0
    %171 = vmatpush.msra.mxu0 0.0
    %172 = vmatpush.msra.mxu0 0.0
    %173 = vmatpush.msra.mxu0 0.0
    %174 = vmatpush.msra.mxu0 0.0
    %175 = vmatpush.msra.mxu0 0.0
    %176 = vmatpush.msra.mxu0 %v147
    %177 = vmatpush.msra.mxu0 %v144
    %178 = vmatmul.f32.gmra.mxu0 %v160
    %v179 = vpop.f32.mrf.mxu0
    %v180 = vadd.f32 %v152, %v179
    %181 = vdwg.mxu0
    %182 = vmatpush.msra.mxu0 0.0
    %183 = vmatpush.msra.mxu0 0.0
    %184 = vmatpush.msra.mxu0 0.0
    %185 = vmatpush.msra.mxu0 0.0
    %186 = vmatpush.msra.mxu0 0.0
    %187 = vmatpush.msra.mxu0 0.0
    %188 = vmatpush.msra.mxu0 0.0
    %189 = vmatpush.msra.mxu0 0.0
    %190 = vmatpush.msra.mxu0 0.0
    %191 = vmatpush.msra.mxu0 0.0
    %192 = vmatpush.msra.mxu0 0.0
    %193 = vmatpush.msra.mxu0 0.0
    %194 = vmatpush.msra.mxu0 0.0
    %195 = vmatpush.msra.mxu0 0.0
    %196 = vmatpush.msra.mxu0 %v148
    %197 = vmatpush.msra.mxu0 %v145
    %198 = vmatmul.f32.gmra.mxu0 %v160
    %v199 = vpop.f32.mrf.mxu0
    %v200 = vadd.f32 %v153, %v199
    %201 = vdwg.mxu0
    %202 = vmatpush.msra.mxu0 0.0
    %203 = vmatpush.msra.mxu0 0.0
    %204 = vmatpush.msra.mxu0 0.0
    %205 = vmatpush.msra.mxu0 0.0
    %206 = vmatpush.msra.mxu0 0.0
    %207 = vmatpush.msra.mxu0 0.0
    %208 = vmatpush.msra.mxu0 0.0
    %209 = vmatpush.msra.mxu0 0.0
    %210 = vmatpush.msra.mxu0 0.0
    %211 = vmatpush.msra.mxu0 0.0
    %212 = vmatpush.msra.mxu0 0.0
    %213 = vmatpush.msra.mxu0 0.0
    %214 = vmatpush.msra.mxu0 0.0
    %215 = vmatpush.msra.mxu0 0.0
    %216 = vmatpush.msra.mxu0 %v149
    %217 = vmatpush.msra.mxu0 %v146
    %218 = vmatmul.f32.gmra.mxu0 %v160
    %v219 = vpop.f32.mrf.mxu0
    %v220 = vadd.f32 %v154, %v219
    %221 = vdwg.mxu0
    %v222 = vxor.u32 %v180, 2147483648
    %v223 = vmul.f32 %v222, 1.442695
    %v224 = vpow.pop %v223
    %v225 = vadd.f32 %v224, 1.0
    %v226 = vrcp.pop %v225
    %v227 = vmul.f32 %v225, %v226
    %v228 = vsub.f32 1.0, %v227
    %v229 = vmul.f32 %v226, %v228
    %v230 = vadd.f32 %v226, %v229
    %vm231 = vweird.f32 %v225
    %vm232 = vweird.f32 %v226
    %vm233 = vmor %vm231, %vm232
    %v234 = vsel %vm233, %v226, %v230
    %v235 = vand.u32 2147483647, %v225
    %vm236 = vcmp.eq.f32.partialorder %v235, 8.507059e+37
    %v237 = vand.u32 %v225, 2147483648
    %v238 = vor.u32 1.1754944e-38, %v237
    %v239 = vsel %vm236, %v238, %v234
    %v240 = vmul.f32 1.0, %v239
    %v241 = vtanh.pop %v200
    %v242 = vxor.u32 %v220, 2147483648
    %v243 = vmul.f32 %v242, 1.442695
    %v244 = vpow.pop %v243
    %v245 = vadd.f32 %v244, 1.0
    %v246 = vrcp.pop %v245
    %v247 = vmul.f32 %v245, %v246
    %v248 = vsub.f32 1.0, %v247
    %v249 = vmul.f32 %v246, %v248
    %v250 = vadd.f32 %v246, %v249
    %vm251 = vweird.f32 %v245
    %vm252 = vweird.f32 %v246
    %vm253 = vmor %vm251, %vm252
    %v254 = vsel %vm253, %v246, %v250
    %v255 = vand.u32 2147483647, %v245
    %vm256 = vcmp.eq.f32.partialorder %v255, 8.507059e+37
    %v257 = vand.u32 %v245, 2147483648
    %v258 = vor.u32 1.1754944e-38, %v257
    %v259 = vsel %vm256, %v258, %v254
    %v260 = vmul.f32 1.0, %v259
    %v261 = vmul.f32 %v240, %v241
    %v262 = vtanh.pop %v261
    %v263 = vmul.f32 %v260, %v262
    %v264 = vld [vmem:[#allocation7] sm:$0xff]
    %v265 = vld [vmem:[#allocation7 + $0x8] sm:$0xff]
    %v266 = vld [vmem:[#allocation7 + $0x10] sm:$0xff]
    %v267 = vld [vmem:[#allocation7 + $0x18] sm:$0xff]
    %v268 = vld [vmem:[#allocation7 + $0x20] sm:$0xff]
    %v269 = vld [vmem:[#allocation7 + $0x28] sm:$0xff]
    %v270 = vld [vmem:[#allocation7 + $0x30] sm:$0xff]
    %v271 = vld [vmem:[#allocation7 + $0x38] sm:$0xff]
    %v272 = vld [vmem:[#allocation7 + $0x40] sm:$0xff]
    %v273 = vld [vmem:[#allocation7 + $0x48] sm:$0xff]
    %v274 = vld [vmem:[#allocation7 + $0x50] sm:$0xff]
    %v275 = vld [vmem:[#allocation7 + $0x58] sm:$0xff]
    %v276 = vld [vmem:[#allocation7 + $0x60] sm:$0xff]
    %v277 = vld [vmem:[#allocation7 + $0x68] sm:$0xff]
    %v278 = vld [vmem:[#allocation7 + $0x70] sm:$0xff]
    %v279 = vld [vmem:[#allocation7 + $0x78] sm:$0xff]
    %v280 = vld [vmem:[#allocation7 + $0x80] sm:$0xff]
    %v281 = vld [vmem:[#allocation7 + $0x88] sm:$0xff]
    %v282 = vld [vmem:[#allocation7 + $0x90] sm:$0xff]
    %v283 = vld [vmem:[#allocation7 + $0x98] sm:$0xff]
    %v284 = vld [vmem:[#allocation7 + $0xa0] sm:$0xff]
    %v285 = vld [vmem:[#allocation7 + $0xa8] sm:$0xff]
    %v286 = vld [vmem:[#allocation7 + $0xb0] sm:$0xff]
    %v287 = vld [vmem:[#allocation7 + $0xb8] sm:$0xff]
    %v288 = vld [vmem:[#allocation7 + $0xc0] sm:$0xff]
    %v289 = vld [vmem:[#allocation7 + $0xc8] sm:$0xff]
    %v290 = vld [vmem:[#allocation7 + $0xd0] sm:$0xff]
    %v291 = vld [vmem:[#allocation7 + $0xd8] sm:$0xff]
    %v292 = vld [vmem:[#allocation7 + $0xe0] sm:$0xff]
    %v293 = vld [vmem:[#allocation7 + $0xe8] sm:$0xff]
    %v294 = vld [vmem:[#allocation7 + $0xf0] sm:$0xff]
    %v295 = vld [vmem:[#allocation7 + $0xf8] sm:$0xff]
    %v296 = vld [vmem:[#allocation7 + $0x100] sm:$0xff]
    %v297 = vld [vmem:[#allocation7 + $0x108] sm:$0xff]
    %v298 = vld [vmem:[#allocation7 + $0x110] sm:$0xff]
    %v299 = vld [vmem:[#allocation7 + $0x118] sm:$0xff]
    %v300 = vld [vmem:[#allocation7 + $0x120] sm:$0xff]
    %v301 = vld [vmem:[#allocation7 + $0x128] sm:$0xff]
    %v302 = vld [vmem:[#allocation7 + $0x130] sm:$0xff]
    %v303 = vld [vmem:[#allocation7 + $0x138] sm:$0xff]
    %v304 = vld [vmem:[#allocation7 + $0x140] sm:$0xff]
    %v305 = vld [vmem:[#allocation7 + $0x148] sm:$0xff]
    %v306 = vld [vmem:[#allocation7 + $0x150] sm:$0xff]
    %v307 = vld [vmem:[#allocation7 + $0x158] sm:$0xff]
    %v308 = vld [vmem:[#allocation7 + $0x160] sm:$0xff]
    %v309 = vld [vmem:[#allocation7 + $0x168] sm:$0xff]
    %v310 = vld [vmem:[#allocation7 + $0x170] sm:$0xff]
    %v311 = vld [vmem:[#allocation7 + $0x178] sm:$0xff]
    %v312 = vld [vmem:[%s4] sm:$0x7]
    %v314 = vperm.slane %v312, 0
    %v315 = vperm.slane %v312, 1
    %v316 = vperm.slane %v312, 2
    %320 = vmatpush.msra.mxu0 %v309
    %321 = vmatpush.msra.mxu0 %v306
    %322 = vmatpush.msra.mxu0 %v303
    %323 = vmatpush.msra.mxu0 %v300
    %324 = vmatpush.msra.mxu0 %v297
    %325 = vmatpush.msra.mxu0 %v294
    %326 = vmatpush.msra.mxu0 %v291
    %327 = vmatpush.msra.mxu0 %v288
    %328 = vmatpush.msra.mxu0 %v285
    %329 = vmatpush.msra.mxu0 %v282
    %330 = vmatpush.msra.mxu0 %v279
    %331 = vmatpush.msra.mxu0 %v276
    %332 = vmatpush.msra.mxu0 %v273
    %333 = vmatpush.msra.mxu0 %v270
    %334 = vmatpush.msra.mxu0 %v267
    %335 = vmatpush.msra.mxu0 %v264
    %336 = vmatmul.f32.gmra.mxu0 %v263
    %v337 = vpop.f32.mrf.mxu0
    %v338 = vadd.f32 %v314, %v337
    %339 = vdwg.mxu0
    %340 = vmatpush.msra.mxu0 %v310
    %341 = vmatpush.msra.mxu0 %v307
    %342 = vmatpush.msra.mxu0 %v304
    %343 = vmatpush.msra.mxu0 %v301
    %344 = vmatpush.msra.mxu0 %v298
    %345 = vmatpush.msra.mxu0 %v295
    %346 = vmatpush.msra.mxu0 %v292
    %347 = vmatpush.msra.mxu0 %v289
    %348 = vmatpush.msra.mxu0 %v286
    %349 = vmatpush.msra.mxu0 %v283
    %350 = vmatpush.msra.mxu0 %v280
    %351 = vmatpush.msra.mxu0 %v277
    %352 = vmatpush.msra.mxu0 %v274
    %353 = vmatpush.msra.mxu0 %v271
    %354 = vmatpush.msra.mxu0 %v268
    %355 = vmatpush.msra.mxu0 %v265
    %356 = vmatmul.f32.gmra.mxu0 %v263
    %v357 = vpop.f32.mrf.mxu0
    %v358 = vadd.f32 %v315, %v357
    %359 = vdwg.mxu0
    %360 = vmatpush.msra.mxu0 %v311
    %361 = vmatpush.msra.mxu0 %v308
    %362 = vmatpush.msra.mxu0 %v305
    %363 = vmatpush.msra.mxu0 %v302
    %364 = vmatpush.msra.mxu0 %v299
    %365 = vmatpush.msra.mxu0 %v296
    %366 = vmatpush.msra.mxu0 %v293
    %367 = vmatpush.msra.mxu0 %v290
    %368 = vmatpush.msra.mxu0 %v287
    %369 = vmatpush.msra.mxu0 %v284
    %370 = vmatpush.msra.mxu0 %v281
    %371 = vmatpush.msra.mxu0 %v278
    %372 = vmatpush.msra.mxu0 %v275
    %373 = vmatpush.msra.mxu0 %v272
    %374 = vmatpush.msra.mxu0 %v269
    %375 = vmatpush.msra.mxu0 %v266
    %376 = vmatmul.f32.gmra.mxu0 %v263
    %v377 = vpop.f32.mrf.mxu0
    %v378 = vadd.f32 %v316, %v377
    %379 = vdwg.mxu0
    %v380 = vxor.u32 %v338, 2147483648
    %v381 = vmul.f32 %v380, 1.442695
    %v382 = vpow.pop %v381
    %v383 = vadd.f32 %v382, 1.0
    %v384 = vrcp.pop %v383
    %v385 = vmul.f32 %v383, %v384
    %v386 = vsub.f32 1.0, %v385
    %v387 = vmul.f32 %v384, %v386
    %v388 = vadd.f32 %v384, %v387
    %vm389 = vweird.f32 %v383
    %vm390 = vweird.f32 %v384
    %vm391 = vmor %vm389, %vm390
    %v392 = vsel %vm391, %v384, %v388
    %v393 = vand.u32 2147483647, %v383
    %vm394 = vcmp.eq.f32.partialorder %v393, 8.507059e+37
    %v395 = vand.u32 %v383, 2147483648
    %v396 = vor.u32 1.1754944e-38, %v395
    %v397 = vsel %vm394, %v396, %v392
    %v398 = vmul.f32 1.0, %v397
    %v399 = vtanh.pop %v358
    %v400 = vxor.u32 %v378, 2147483648
    %v401 = vmul.f32 %v400, 1.442695
    %v402 = vpow.pop %v401
    %v403 = vadd.f32 %v402, 1.0
    %v404 = vrcp.pop %v403
    %v405 = vmul.f32 %v403, %v404
    %v406 = vsub.f32 1.0, %v405
    %v407 = vmul.f32 %v404, %v406
    %v408 = vadd.f32 %v404, %v407
    %vm409 = vweird.f32 %v403
    %vm410 = vweird.f32 %v404
    %vm411 = vmor %vm409, %vm410
    %v412 = vsel %vm411, %v404, %v408
    %v413 = vand.u32 2147483647, %v403
    %vm414 = vcmp.eq.f32.partialorder %v413, 8.507059e+37
    %v415 = vand.u32 %v403, 2147483648
    %v416 = vor.u32 1.1754944e-38, %v415
    %v417 = vsel %vm414, %v416, %v412
    %v418 = vmul.f32 1.0, %v417
    %v419 = vmul.f32 %v398, %v399
    %v420 = vtanh.pop %v419
    %v421 = vmul.f32 %v418, %v420
    %v422 = vld [vmem:[#allocation9] sm:$0xff]
    %v423 = vld [vmem:[#allocation9 + $0x8] sm:$0xff]
    %v424 = vld [vmem:[#allocation9 + $0x10] sm:$0xff]
    %v425 = vld [vmem:[#allocation9 + $0x18] sm:$0xff]
    %v426 = vld [vmem:[#allocation9 + $0x20] sm:$0xff]
    %v427 = vld [vmem:[#allocation9 + $0x28] sm:$0xff]
    %v428 = vld [vmem:[#allocation9 + $0x30] sm:$0xff]
    %v429 = vld [vmem:[#allocation9 + $0x38] sm:$0xff]
    %v430 = vld [vmem:[#allocation9 + $0x40] sm:$0xff]
    %v431 = vld [vmem:[#allocation9 + $0x48] sm:$0xff]
    %v432 = vld [vmem:[#allocation9 + $0x50] sm:$0xff]
    %v433 = vld [vmem:[#allocation9 + $0x58] sm:$0xff]
    %v434 = vld [vmem:[#allocation9 + $0x60] sm:$0xff]
    %v435 = vld [vmem:[#allocation9 + $0x68] sm:$0xff]
    %v436 = vld [vmem:[#allocation9 + $0x70] sm:$0xff]
    %v437 = vld [vmem:[#allocation9 + $0x78] sm:$0xff]
    %v438 = vld [vmem:[%s6] sm:$0x1]
    %v440 = vperm.slane %v438, 0
    %442 = vmatpush.msra.mxu0 %v437
    %443 = vmatpush.msra.mxu0 %v436
    %444 = vmatpush.msra.mxu0 %v435
    %445 = vmatpush.msra.mxu0 %v434
    %446 = vmatpush.msra.mxu0 %v433
    %447 = vmatpush.msra.mxu0 %v432
    %448 = vmatpush.msra.mxu0 %v431
    %449 = vmatpush.msra.mxu0 %v430
    %450 = vmatpush.msra.mxu0 %v429
    %451 = vmatpush.msra.mxu0 %v428
    %452 = vmatpush.msra.mxu0 %v427
    %453 = vmatpush.msra.mxu0 %v426
    %454 = vmatpush.msra.mxu0 %v425
    %455 = vmatpush.msra.mxu0 %v424
    %456 = vmatpush.msra.mxu0 %v423
    %457 = vmatpush.msra.mxu0 %v422
    %458 = vmatmul.f32.gmra.mxu0 %v421
    %v459 = vpop.f32.mrf.mxu0
    %v460 = vadd.f32 %v440, %v459
    %461 = vdwg.mxu0
    %v462 = vmax.f32 %v460, 0.0
    %v463 = vld [vmem:[#allocation10] sm:$0xff]
    %v464 = vld [vmem:[#allocation10 + $0x8] sm:$0xff]
    %v465 = vld [vmem:[#allocation10 + $0x10] sm:$0xff]
    %v466 = vld [vmem:[#allocation10 + $0x18] sm:$0xff]
    %v467 = vld [vmem:[#allocation10 + $0x20] sm:$0xff]
    %v468 = vld [vmem:[#allocation10 + $0x28] sm:$0xff]
    %v469 = vld [vmem:[#allocation10 + $0x30] sm:$0xff]
    %v470 = vld [vmem:[#allocation10 + $0x38] sm:$0xff]
    %v471 = vld [vmem:[#allocation10 + $0x40] sm:$0xff]
    %v472 = vld [vmem:[#allocation10 + $0x48] sm:$0xff]
    %v473 = vld [vmem:[#allocation10 + $0x50] sm:$0xff]
    %v474 = vld [vmem:[#allocation10 + $0x58] sm:$0xff]
    %v475 = vld [vmem:[#allocation10 + $0x60] sm:$0xff]
    %v476 = vld [vmem:[#allocation10 + $0x68] sm:$0xff]
    %v477 = vld [vmem:[#allocation10 + $0x70] sm:$0xff]
    %v478 = vld [vmem:[#allocation10 + $0x78] sm:$0xff]
    %v479 = vld [vmem:[%s8] sm:$0x1]
    %v481 = vperm.slane %v479, 0
    %483 = vmatpush.msra.mxu0 %v478
    %484 = vmatpush.msra.mxu0 %v477
    %485 = vmatpush.msra.mxu0 %v476
    %486 = vmatpush.msra.mxu0 %v475
    %487 = vmatpush.msra.mxu0 %v474
    %488 = vmatpush.msra.mxu0 %v473
    %489 = vmatpush.msra.mxu0 %v472
    %490 = vmatpush.msra.mxu0 %v471
    %491 = vmatpush.msra.mxu0 %v470
    %492 = vmatpush.msra.mxu0 %v469
    %493 = vmatpush.msra.mxu0 %v468
    %494 = vmatpush.msra.mxu0 %v467
    %495 = vmatpush.msra.mxu0 %v466
    %496 = vmatpush.msra.mxu0 %v465
    %497 = vmatpush.msra.mxu0 %v464
    %498 = vmatpush.msra.mxu0 %v463
    %499 = vmatmul.f32.gmra.mxu0 %v462
    %v500 = vpop.f32.mrf.mxu0
    %v501 = vadd.f32 %v481, %v500
    %502 = vdwg.mxu0
    %v503 = vmax.f32 %v501, 0.0
    %v504 = vld [vmem:[#allocation12] sm:$0xff]
    %v505 = vld [vmem:[#allocation12 + $0x8] sm:$0xff]
    %v506 = vld [vmem:[#allocation12 + $0x10] sm:$0xff]
    %v507 = vld [vmem:[#allocation12 + $0x18] sm:$0xff]
    %v508 = vld [vmem:[#allocation12 + $0x20] sm:$0xff]
    %v509 = vld [vmem:[#allocation12 + $0x28] sm:$0xff]
    %v510 = vld [vmem:[#allocation12 + $0x30] sm:$0xff]
    %v511 = vld [vmem:[#allocation12 + $0x38] sm:$0xff]
    %v512 = vld [vmem:[#allocation12 + $0x40] sm:$0xff]
    %v513 = vld [vmem:[#allocation12 + $0x48] sm:$0xff]
    %v514 = vld [vmem:[#allocation12 + $0x50] sm:$0xff]
    %v515 = vld [vmem:[#allocation12 + $0x58] sm:$0xff]
    %v516 = vld [vmem:[#allocation12 + $0x60] sm:$0xff]
    %v517 = vld [vmem:[#allocation12 + $0x68] sm:$0xff]
    %v518 = vld [vmem:[#allocation12 + $0x70] sm:$0xff]
    %v519 = vld [vmem:[#allocation12 + $0x78] sm:$0xff]
    %v520 = vld [vmem:[%s10] sm:$0x1]
    %v522 = vperm.slane %v520, 0
    %524 = vmatpush.msra.mxu0 %v519
    %525 = vmatpush.msra.mxu0 %v518
    %526 = vmatpush.msra.mxu0 %v517
    %527 = vmatpush.msra.mxu0 %v516
    %528 = vmatpush.msra.mxu0 %v515
    %529 = vmatpush.msra.mxu0 %v514
    %530 = vmatpush.msra.mxu0 %v513
    %531 = vmatpush.msra.mxu0 %v512
    %532 = vmatpush.msra.mxu0 %v511
    %533 = vmatpush.msra.mxu0 %v510
    %534 = vmatpush.msra.mxu0 %v509
    %535 = vmatpush.msra.mxu0 %v508
    %536 = vmatpush.msra.mxu0 %v507
    %537 = vmatpush.msra.mxu0 %v506
    %538 = vmatpush.msra.mxu0 %v505
    %539 = vmatpush.msra.mxu0 %v504
    %540 = vmatmul.f32.gmra.mxu0 %v503
    %v541 = vpop.f32.mrf.mxu0
    %v542 = vadd.f32 %v522, %v541
    %543 = vdwg.mxu0
    %544 = vst [vmem:[%s11] sm:$0x3] %v542
    // Predicated region
    $region74: #{net_forward.1} parent=1 // pred_check
      _
    $region75: #{net_forward.1} parent=1 // pred_check_branch
      %546 = sbr.rel (0) target = $region77
    $region76: #{net_forward.1} parent=1 // pred_region
      _
    $region77: #{net_forward.1} parent=1 // pred_fallthru
      _
    // Predicated region
    $region78: #{net_forward.1} parent=1 // pred_check
      _
    $region79: #{net_forward.1} parent=1 // pred_check_branch
      %548 = sbr.rel (0) target = $region81
    $region80: #{net_forward.1} parent=1 // pred_region
      _
    $region81: #{net_forward.1} parent=1 // pred_fallthru
      _
    %549 = vsyncpa [#allocation3], 1
    %550 = vsyncpa [#allocation5], 1
    %551 = vsyncpa [#allocation8], 1
    %552 = vsyncpa [#allocation11], 1

</llo_original>
